<compile_context>
chip_gen: v6e
topology: v6e:2x2x1
jax: 0.10.0
libtpu: 0.0.40
codegen_flags: <defaults>
</compile_context>

<pallas_src>
import functools

import numpy as np
import jax
import jax.numpy as jnp
from jax import lax
from jax.experimental import pallas as pl
from jax.experimental.pallas import tpu as pltpu

LAYER_SIZES = [64, 128, 256, 512, 1024]
LSTM_INPUT_SIZE = 400
HIDDEN_MULT = 3

_VMEM_SPEC = pl.BlockSpec(memory_space=pltpu.MemorySpace.VMEM)


@functools.lru_cache(maxsize=None)
def _vmem_limit():
    """Per-generation VMEM limit: ~0.8 * physical (51 MiB v7x, ~102 MiB v5e/v6e)."""
    try:
        cap = pltpu.get_tpu_info().vmem_capacity_bytes
    except Exception:
        cap = None
    if not cap:
        return 48 * 1024 * 1024
    return max(32 * 1024 * 1024, min(int(cap * 0.8), 110 * 1024 * 1024))


def _pick_tile(dim, candidates):
    """Largest candidate dividing `dim` that leaves >= 2 blocks (v7x megacore),
    else the largest dividing candidate, else the full dim."""
    for c in candidates:
        if c <= dim and dim % c == 0 and dim // c >= 2:
            return c
    for c in candidates:
        if c <= dim and dim % c == 0:
            return c
    return dim


# ----------------------------------------------------------------------------
# Tiled matmul kernel (bf16 operands, f32 accumulate, M x N megacore grid)
# ----------------------------------------------------------------------------
def _mm_kernel(a_ref, b_ref, bias_ref, o_ref, *, relu):
    acc = jnp.dot(a_ref[...], b_ref[...], preferred_element_type=jnp.float32)
    acc = acc + bias_ref[...]
    if relu:
        acc = jnp.maximum(acc, 0.0)
    o_ref[...] = acc.astype(o_ref.dtype)


def pallas_matmul(a, b, bias=None, relu=False, out_dtype=jnp.bfloat16):
    a = a.astype(jnp.bfloat16)
    b = b.astype(jnp.bfloat16)
    m, k = a.shape
    k2, n = b.shape
    assert k == k2, (a.shape, b.shape)
    if bias is None:
        bias = jnp.zeros((1, 1), jnp.float32)
    bias = bias.astype(jnp.float32)

    bm = _pick_tile(m, (512, 256, 128, 64))
    bn = _pick_tile(n, (1024, 512, 256, 128))

    if bias.shape == (m, 1):
        bias_spec = pl.BlockSpec((bm, 1), lambda i, j: (i, 0))
    elif bias.shape == (1, n):
        bias_spec = pl.BlockSpec((1, bn), lambda i, j: (0, j))
    else:
        bias_spec = pl.BlockSpec((1, 1), lambda i, j: (0, 0))

    return pl.pallas_call(
        functools.partial(_mm_kernel, relu=relu),
        out_shape=jax.ShapeDtypeStruct((m, n), out_dtype),
        grid=(m // bm, n // bn),
        in_specs=[pl.BlockSpec((bm, k), lambda i, j: (i, 0)),
                  pl.BlockSpec((k, bn), lambda i, j: (0, j)),
                  bias_spec],
        out_specs=pl.BlockSpec((bm, bn), lambda i, j: (i, j)),
        compiler_params=pltpu.CompilerParams(
            dimension_semantics=("parallel", "parallel"),
            vmem_limit_bytes=_vmem_limit()),
    )(a, b, bias)


# ----------------------------------------------------------------------------
# Conv1d kernel: im2col inside the kernel (shifted lane slices), tiled over O
# ----------------------------------------------------------------------------
def _conv1d_kernel(x_ref, w_ref, b_ref, o_ref, *, taps, relu):
    t = o_ref.shape[1]
    acc = jnp.zeros(o_ref.shape, jnp.float32)
    for tap in range(taps):                      # static shifted slices of x
        acc = acc + jnp.dot(w_ref[tap], x_ref[:, pl.ds(tap, t)],
                            preferred_element_type=jnp.float32)
    acc = acc + b_ref[...]
    if relu:
        acc = jnp.maximum(acc, 0.0)
    o_ref[...] = acc.astype(o_ref.dtype)


def conv1d(x, w, b, relu=False, out_dtype=jnp.bfloat16):
    """x: (C, T);  w: (O, C, K) (PyTorch Conv1d layout);  'same' padding."""
    o_ch, c_ch, k = w.shape
    t = x.shape[1]
    pad = (k - 1) // 2
    # bf16 on the MXU; keep f32 operands only for the tiny first conv (C_in < 8)
    cdt = jnp.bfloat16 if c_ch >= 8 else jnp.float32
    xp = x.astype(cdt)
    if pad:
        # TODO(synk): fold 'same' padding into the kernel (roll + edge mask).
        xp = jnp.pad(xp, ((0, 0), (pad, pad)))
    w_t = jnp.transpose(w, (2, 0, 1)).astype(cdt)                # (K, O, C)
    bias = (jnp.zeros((o_ch,), jnp.float32) if b is None else b)
    bias = bias.astype(jnp.float32).reshape(o_ch, 1)

    bo = _pick_tile(o_ch, (512, 256, 128, 64, 32))
    return pl.pallas_call(
        functools.partial(_conv1d_kernel, taps=k, relu=relu),
        out_shape=jax.ShapeDtypeStruct((o_ch, t), out_dtype),
        grid=(o_ch // bo,),
        in_specs=[pl.BlockSpec((c_ch, t + 2 * pad), lambda i: (0, 0)),
                  pl.BlockSpec((k, bo, c_ch), lambda i: (0, i, 0)),
                  pl.BlockSpec((bo, 1), lambda i: (i, 0))],
        out_specs=pl.BlockSpec((bo, t), lambda i: (i, 0)),
        compiler_params=pltpu.CompilerParams(
            dimension_semantics=("parallel",),
            vmem_limit_bytes=_vmem_limit()),
    )(xp, w_t, bias)


def conv_block(x, p):
    return conv1d(x, p['w'], p['b'], relu=True)


def conv_transpose1d(x, w, b):
    """x: (C_in, T); w: (C_in, C_out, 2); stride=2, kernel=2 (no overlap).
    One bf16 Pallas matmul on a tap-concatenated weight, then a tiny interleave."""
    c_in, c_out, k = w.shape
    t = x.shape[1]
    w2 = jnp.concatenate([w[:, :, tap].T for tap in range(k)], axis=0)  # (K*C_out, C_in)
    b2 = jnp.concatenate([b] * k).reshape(k * c_out, 1)
    y = pallas_matmul(w2, x, bias=b2, out_dtype=jnp.bfloat16)           # (K*C_out, T)
    # TODO(synk): do this tap interleave inside the kernel (strided lane store)
    # to avoid one XLA transpose / HBM round trip per decoder stage.
    y = jnp.moveaxis(y.reshape(k, c_out, t), 0, -1)                     # (C_out, T, K)
    return y.reshape(c_out, t * k)


def maxpool2(x):
    # TODO(synk): fold the pair-max into the following conv kernel.
    c, t = x.shape
    return jnp.max(x.reshape(c, t // 2, 2), axis=-1)


# ----------------------------------------------------------------------------
# Linear interpolation (align_corners=False): 2-tap gather + VPU fma kernel
# ----------------------------------------------------------------------------
def _interp_kernel(x0_ref, x1_ref, w0_ref, w1_ref, o_ref):
    acc = (x0_ref[...].astype(jnp.float32) * w0_ref[...] +
           x1_ref[...].astype(jnp.float32) * w1_ref[...])
    o_ref[...] = acc.astype(o_ref.dtype)


def interp_linear(x, t_out, out_dtype=jnp.bfloat16):
    c, t_in = x.shape
    if t_in == t_out:
        return x.astype(out_dtype)
    scale = t_in / t_out
    j = np.arange(t_out)
    src = np.maximum((j + 0.5) * scale - 0.5, 0.0)
    i0 = np.minimum(np.floor(src).astype(np.int32), t_in - 1)
    i1 = np.minimum(i0 + 1, t_in - 1)
    w1 = (src - i0).astype(np.float32)
    w0 = (1.0 - w1).astype(np.float32)

    # TODO(synk): move the 2-tap gather inside the kernel (lane gather on a
    # VMEM-resident x) to remove the two XLA-materialized gathered copies.
    xb = x.astype(jnp.bfloat16)
    x0 = jnp.take(xb, jnp.asarray(i0), axis=1)       # static-index gather (XLA)
    x1 = jnp.take(xb, jnp.asarray(i1), axis=1)

    bc = _pick_tile(c, (512, 256, 128, 64, 32))
    return pl.pallas_call(
        _interp_kernel,
        out_shape=jax.ShapeDtypeStruct((c, t_out), out_dtype),
        grid=(c // bc,),
        in_specs=[pl.BlockSpec((bc, t_out), lambda i: (i, 0)),
                  pl.BlockSpec((bc, t_out), lambda i: (i, 0)),
                  pl.BlockSpec((1, t_out), lambda i: (0, 0)),
                  pl.BlockSpec((1, t_out), lambda i: (0, 0))],
        out_specs=pl.BlockSpec((bc, t_out), lambda i: (i, 0)),
        compiler_params=pltpu.CompilerParams(
            dimension_semantics=("parallel",),
            vmem_limit_bytes=_vmem_limit()),
    )(x0, x1, jnp.asarray(w0).reshape(1, t_out), jnp.asarray(w1).reshape(1, t_out))


def glue1d(x, p, out_sample_size):
    """Glue1D: 1x1 conv (channel projection) + linear interpolation in time."""
    y = conv1d(x, p['w'], p['b'])
    return interp_linear(y, out_sample_size)


# ----------------------------------------------------------------------------
# LSTM: fused-gate, unpadded bf16 W_hh recurrence, 16-step blocks
# ----------------------------------------------------------------------------
def _lstm_kernel(pre_ref, whh_ref, out_ref, h_scr, c_scr, buf_scr, pre_scr):
    """pre_ref: (S, 4H) f32  = x @ W_ih^T + (b_ih + b_hh)  (gate order i,f,g,o)
       whh_ref: (H, 4H) bf16 = W_hh^T (all four gates fused, no padding)
       out_ref: (S, H) bf16  = all hidden states."""
    h = h_scr.shape[1]
    blk = buf_scr.shape[0]                   # 16 steps per block
    nblk = out_ref.shape[0] // blk
    h_scr[...] = jnp.zeros_like(h_scr)
    c_scr[...] = jnp.zeros_like(c_scr)

    def block(b, carry):
        t0 = pl.multiple_of(b * blk, blk)
        # One aligned tile load of the pre-activations for this block; static
        # row slices inside the unrolled step loop.
        pre_scr[...] = pre_ref[pl.ds(t0, blk), :]
        for j in range(blk):                                   # unrolled steps
            rec = jnp.dot(h_scr[...].astype(jnp.bfloat16), whh_ref[...],
                          preferred_element_type=jnp.float32)  # fused 4-gate matvec
            gates = pre_scr[pl.ds(j, 1), :] + rec              # (1, 4H)
            gi = jax.nn.sigmoid(gates[:, 0 * h:1 * h])
            gf = jax.nn.sigmoid(gates[:, 1 * h:2 * h])
            gg = jnp.tanh(gates[:, 2 * h:3 * h])
            go = jax.nn.sigmoid(gates[:, 3 * h:4 * h])
            c = gf * c_scr[...] + gi * gg
            hh = go * jnp.tanh(c)
            c_scr[...] = c
            h_scr[...] = hh
            buf_scr[pl.ds(j, 1), :] = hh
        out_ref[pl.ds(t0, blk), :] = buf_scr[...].astype(out_ref.dtype)
        return carry

    lax.fori_loop(0, nblk, block, 0)


def pallas_lstm(x_seq, w_ih, w_hh, b_ih, b_hh):
    """PyTorch nn.LSTM (1 layer, batch=1) semantics.  x_seq: (S, I) -> (S, H) bf16."""
    s, _ = x_seq.shape
    h4 = w_ih.shape[0]
    h = h4 // 4
    assert s % 16 == 0, s
    assert h % 8 == 0, h

    # TODO(synk): int8/fp8 W_hh with per-column scales (per-generation) would
    # roughly halve the weight stream that dominates this kernel.
    w_ih_t = w_ih.T.astype(jnp.bfloat16)                       # (I, 4H)
    whh_t = w_hh.T.astype(jnp.bfloat16)                        # (H, 4H), unpadded
    bias = (b_ih + b_hh).reshape(1, h4).astype(jnp.float32)

    # Input contribution to all gates: one tiled MXU matmul, kept in f32 to
    # limit error compounding over the 1024 recurrent steps.
    pre = pallas_matmul(x_seq, w_ih_t, bias=bias, out_dtype=jnp.float32)  # (S, 4H)

    out = pl.pallas_call(
        _lstm_kernel,
        out_shape=jax.ShapeDtypeStruct((s, h), jnp.bfloat16),
        in_specs=[_VMEM_SPEC, _VMEM_SPEC],
        out_specs=_VMEM_SPEC,
        scratch_shapes=[pltpu.VMEM((1, h), jnp.float32),      # h state
                        pltpu.VMEM((1, h), jnp.float32),      # c state
                        pltpu.VMEM((16, h), jnp.float32),     # output buffer
                        pltpu.VMEM((16, h4), jnp.float32)],   # pre block
        compiler_params=pltpu.CompilerParams(vmem_limit_bytes=_vmem_limit()),
    )(pre, whh_t)
    return out                                                 # (S, H) bf16


# ----------------------------------------------------------------------------
# Model: parameters + forward
# ----------------------------------------------------------------------------
def init_params(key, in_channels, samples_per_batch):
    keys = iter(jax.random.split(key, 128))

    def w(shape):
        fan_in = int(np.prod(shape[1:])) if len(shape) > 1 else shape[0]
        scale = 1.0 / np.sqrt(max(fan_in, 1))
        return scale * jax.random.normal(next(keys), shape, dtype=jnp.float32)

    ls = LAYER_SIZES
    H = LSTM_INPUT_SIZE * HIDDEN_MULT
    down_stacked = sum(ls[1:])
    max_ls = max(ls[1:])

    params = {
        'first': {'w': w((ls[0], in_channels, 3)), 'b': w((ls[0],))},
        'down': [{'w': w((ls[i + 1], ls[i], 3)), 'b': w((ls[i + 1],))}
                 for i in range(len(ls) - 1)],
        'dense_lstm': {
            'glue': {'w': w((max_ls, down_stacked, 1)), 'b': w((max_ls,))},
            'lstm': {'w_ih': w((4 * H, LSTM_INPUT_SIZE)),
                     'w_hh': w((4 * H, H)),
                     'b_ih': w((4 * H,)),
                     'b_hh': w((4 * H,))},
        },
    }

    first_up_T = samples_per_batch
    for _ in range(len(ls) - 1):
        first_up_T //= 2
    ups = []
    for i in range(len(ls) - 2):
        cin = ls[-(i + 1)]
        cout = ls[-(i + 2)]
        in_sample = first_up_T * 2 * (2 ** i)
        ups.append({
            'matcher': {'w': w((cin, max_ls, 1)), 'b': w((cin,))},
            'tw': w((cin, cin // 2, 2)), 'tb': w((cin // 2,)),
            'conv': {'w': w((cout, cin, 3)), 'b': w((cout,))},
            'in_sample_size': in_sample,
        })
    params['up'] = ups
    params['last'] = {
        'blocks': [{'w': w((ls[1], ls[1], 3)), 'b': w((ls[1],))} for _ in range(4)],
        'final': {'w': w((in_channels, ls[1], 1)), 'b': w((in_channels,))},
    }
    return params


def clarification_forward(params, x):
    """x: (in_channels, T) float32  ->  (T // 2,) float32."""
    # first layer
    x = conv_block(x, params['first'])                     # (64, T) bf16

    # encoder
    down_outputs = []
    for p in params['down']:
        x = maxpool2(x)
        x = conv_block(x, p)
        down_outputs.append(x)

    # DenseLSTM
    target_t = down_outputs[0].shape[1]                    # T // 2
    ups = [interp_linear(d, target_t) for d in down_outputs]
    cat = jnp.concatenate(ups, axis=0)                     # (1920, T//2)
    z = glue1d(cat, params['dense_lstm']['glue'], LSTM_INPUT_SIZE)   # (1024, 400)
    lp = params['dense_lstm']['lstm']
    lstm_out = pallas_lstm(z, lp['w_ih'], lp['w_hh'], lp['b_ih'], lp['b_hh'])  # (1024, 1200)

    # decoder
    down_rev = list(reversed(down_outputs))
    for i, p in enumerate(params['up']):
        skip = down_rev[i + 1]
        ln = glue1d(lstm_out, p['matcher'], p['in_sample_size'])     # (C_in, T_i)
        xt = conv_transpose1d(x, p['tw'], p['tb'])                   # (C_in//2, T_i)
        # Matches the PyTorch module literally: diff is a CHANNEL difference
        # (size()[1] in NCL) but F.pad with a 2-tuple pads the LAST (time) dim.
        # In this architecture diff is always 0, so it is a no-op either way.
        diff = skip.shape[0] - xt.shape[0]
        if diff != 0:
            xt = jnp.pad(xt, ((0, 0), (diff // 2, diff - diff // 2)))
        x = jnp.concatenate([skip, xt], axis=0)                      # (C_in, T_i)
        x = x + ln
        x = conv_block(x, p['conv'])                                 # (C_out, T_i)

    # output head
    for p in params['last']['blocks']:
        x = conv_block(x, p)
    fl = params['last']['final']
    x = conv1d(x, fl['w'], fl['b'])                                  # (1, T//2)
    return x[0].astype(jnp.float32)                                  # (T//2,)


if __name__ == "__main__":
    key = jax.random.PRNGKey(0)
    kp, kx = jax.random.split(key)

    in_channels = 1
    samples_per_batch = 64   # small T; must be divisible by 16 (4 downsamplings)

    params = init_params(kp, in_channels, samples_per_batch)
    x = jax.random.normal(kx, (in_channels, samples_per_batch), dtype=jnp.float32)

    out = clarification_forward(params, x)
    out = jax.block_until_ready(out)

    assert out.shape == (samples_per_batch // 2,), out.shape
    assert bool(jnp.all(jnp.isfinite(out)))
    print("KERNEL_OK")
</pallas_src>

<mosaic_0001>
module attributes {stable_mosaic.version = 11 : i64} {
  func.func @_conv1d_kernel(%arg0: i32, %arg1: memref<1x66xf32, #tpu.memory_space<vmem>>, %arg2: memref<3x32x1xf32, #tpu.memory_space<vmem>>, %arg3: memref<32x1xf32, #tpu.memory_space<vmem>>, %arg4: memref<32x64xbf16, #tpu.memory_space<vmem>>) attributes {dimension_semantics = [#tpu.dimension_semantics<parallel>], iteration_bounds = array<i64: 2>, scalar_prefetch = 0 : i64, scratch_operands = 0 : i64, tpu.core_type = #tpu.core_type<tc>, window_params = [{pipeline_mode = #tpu.pipeline_mode<synchronous>, transform_indices = @transform_0, window_bounds = array<i64: 1, 66>}, {transform_indices = @transform_1, window_bounds = array<i64: 3, 32, 1>}, {transform_indices = @transform_2, window_bounds = array<i64: 32, 1>}, {transform_indices = @transform_3, window_bounds = array<i64: 32, 64>}]} {
    %cst = arith.constant 0.000000e+00 : f32
    %0 = vector.broadcast %cst : f32 to vector<32x64xf32>
    %c0 = arith.constant 0 : index
    %c0_0 = arith.constant 0 : index
    %c0_1 = arith.constant 0 : index
    %1 = vector.load %arg2[%c0, %c0_0, %c0_1] : memref<3x32x1xf32, #tpu.memory_space<vmem>>, vector<1x32x1xf32>
    %2 = vector.shape_cast %1 : vector<1x32x1xf32> to vector<32x1xf32>
    %c0_2 = arith.constant 0 : index
    %c0_3 = arith.constant 0 : index
    %3 = vector.load %arg1[%c0_2, %c0_3] : memref<1x66xf32, #tpu.memory_space<vmem>>, vector<1x64xf32>
    %cst_4 = arith.constant dense<0.000000e+00> : vector<32x64xf32>
    %4 = tpu.matmul %2, %3, %cst_4 {dimension_numbers = #tpu.dot_dimension_numbers<[1], [0], [0], [1], [0, 0, 1, 1], [], []>} : vector<32x1xf32>, vector<1x64xf32>, vector<32x64xf32> -> vector<32x64xf32>
    %5 = arith.addf %0, %4 : vector<32x64xf32>
    %c1 = arith.constant 1 : index
    %c0_5 = arith.constant 0 : index
    %c0_6 = arith.constant 0 : index
    %6 = vector.load %arg2[%c1, %c0_5, %c0_6] : memref<3x32x1xf32, #tpu.memory_space<vmem>>, vector<1x32x1xf32>
    %7 = vector.shape_cast %6 : vector<1x32x1xf32> to vector<32x1xf32>
    %c0_7 = arith.constant 0 : index
    %c1_8 = arith.constant 1 : index
    %8 = vector.load %arg1[%c0_7, %c1_8] : memref<1x66xf32, #tpu.memory_space<vmem>>, vector<1x64xf32>
    %cst_9 = arith.constant dense<0.000000e+00> : vector<32x64xf32>
    %9 = tpu.matmul %7, %8, %cst_9 {dimension_numbers = #tpu.dot_dimension_numbers<[1], [0], [0], [1], [0, 0, 1, 1], [], []>} : vector<32x1xf32>, vector<1x64xf32>, vector<32x64xf32> -> vector<32x64xf32>
    %10 = arith.addf %5, %9 : vector<32x64xf32>
    %c2 = arith.constant 2 : index
    %c0_10 = arith.constant 0 : index
    %c0_11 = arith.constant 0 : index
    %11 = vector.load %arg2[%c2, %c0_10, %c0_11] : memref<3x32x1xf32, #tpu.memory_space<vmem>>, vector<1x32x1xf32>
    %12 = vector.shape_cast %11 : vector<1x32x1xf32> to vector<32x1xf32>
    %c0_12 = arith.constant 0 : index
    %c2_13 = arith.constant 2 : index
    %13 = vector.load %arg1[%c0_12, %c2_13] : memref<1x66xf32, #tpu.memory_space<vmem>>, vector<1x64xf32>
    %cst_14 = arith.constant dense<0.000000e+00> : vector<32x64xf32>
    %14 = tpu.matmul %12, %13, %cst_14 {dimension_numbers = #tpu.dot_dimension_numbers<[1], [0], [0], [1], [0, 0, 1, 1], [], []>} : vector<32x1xf32>, vector<1x64xf32>, vector<32x64xf32> -> vector<32x64xf32>
    %15 = arith.addf %10, %14 : vector<32x64xf32>
    %c0_15 = arith.constant 0 : index
    %c0_16 = arith.constant 0 : index
    %16 = vector.load %arg3[%c0_15, %c0_16] : memref<32x1xf32, #tpu.memory_space<vmem>>, vector<32x1xf32>
    %17 = vector.broadcast %16 : vector<32x1xf32> to vector<32x64xf32>
    %18 = arith.addf %15, %17 : vector<32x64xf32>
    %cst_17 = arith.constant 0.000000e+00 : f32
    %19 = vector.broadcast %cst_17 : f32 to vector<32x64xf32>
    %20 = arith.maximumf %18, %19 : vector<32x64xf32>
    %21 = arith.truncf %20 : vector<32x64xf32> to vector<32x64xbf16>
    %c0_18 = arith.constant 0 : index
    %c0_19 = arith.constant 0 : index
    %22 = vector.load %arg4[%c0_18, %c0_19] : memref<32x64xbf16, #tpu.memory_space<vmem>>, vector<32x64xbf16>
    tpu.vector_store %arg4[%c0_18, %c0_19], %21 {strides = array<i32>} : memref<32x64xbf16, #tpu.memory_space<vmem>>, vector<32x64xbf16>,
    return
  }
  func.func @transform_0(%arg0: i32) -> (i32, i32) {
    %c0_i32 = arith.constant 0 : i32
    %c0_i32_0 = arith.constant 0 : i32
    %c0_i32_1 = arith.constant 0 : i32
    return %c0_i32, %c0_i32_0 : i32, i32
  }
  func.func @transform_1(%arg0: i32) -> (i32, i32, i32) {
    %c0_i32 = arith.constant 0 : i32
    %c0_i32_0 = arith.constant 0 : i32
    %c0_i32_1 = arith.constant 0 : i32
    return %c0_i32, %arg0, %c0_i32_0 : i32, i32, i32
  }
  func.func @transform_2(%arg0: i32) -> (i32, i32) {
    %c0_i32 = arith.constant 0 : i32
    %c0_i32_0 = arith.constant 0 : i32
    return %arg0, %c0_i32 : i32, i32
  }
  func.func @transform_3(%arg0: i32) -> (i32, i32) {
    %c0_i32 = arith.constant 0 : i32
    %c0_i32_0 = arith.constant 0 : i32
    return %arg0, %c0_i32 : i32, i32
  }
}

</mosaic_0001>

<llo_original>
// kernel: tpu_custom_call.1
$region0: #{tpu_custom_call.1}
  #allocation0 [shape = 'u32[]', space=smem, size = 0x4, offset = 0x4, fixed_abs, tag = 'smem constant byte address 0x4 - core index']
  #allocation1 [shape = 'u32[144,128]{1,0:T(1,128)}', space=vmem, size = 0x12000, scoped, tag = 'internal scratch']
  %s0 = inlined_call_operand.vmem [shape: f32[1,66], index: 0, kind: input, shape index: {}]
  %s1 = inlined_call_operand.vmem [shape: f32[3,64,1], index: 1, kind: input, shape index: {}]
  %s2 = inlined_call_operand.vmem [shape: f32[64,1], index: 2, kind: input, shape index: {}]
  %s3 = inlined_call_operand.hbm [shape: bf16[64,64], index: 3, kind: output, shape index: {}]
  %s4 = sld [smem:[#allocation0]]
  $region83: #{tpu_custom_call.1} parent=0
    _
  %s6 = ssub.s32 1, %s4
  %s7 = scalar_select 0, %s6, %s4
  $region1: #{tpu_custom_call.1} parent=0
    #allocation2 [shape = 'u8[98304]{0}', space=vmem, size = 0x18000, scoped, tag = 'input window, operand 1']
    #allocation3 [shape = 'u8[16384]{0}', space=vmem, size = 0x4000, scoped, tag = 'output window, operand 0']
    #allocation4 [shape = 's32[2]{0}', space=sflag, size = 0x8, scoped, tag = 'scoped memory for tpu_custom_call.1']
    %8 = vsyncpa [#allocation4], 0
    %s9 = scalar_lea.sflag [#allocation4], 1
    %10 = vsyncpa %s9, 0
    loop: start=0, step=1, limit=4
    $region2: #{tpu_custom_call.1} parent=1 // loop_pre_header
      _
    $region3: #{tpu_custom_call.1} parent=1 // loop_header
      %s12 = sphi 0, %s16
      %p13 = scmp.ge.s32.totalorder %s12, 4
      %s20 = sphi 0, %s20
      %s22 = sphi 0, %s20
      %s23 = sphi 0, %s22
      %s37 = sphi 0, %s23
      %s43 = sphi 0, %s45
      %s46 = sphi 0, %s43
      %s47 = sphi 0, %s46
      %s63 = sphi 0, %s47
      %s69 = sphi 0, %s71
      %s72 = sphi 0, %s69
      %s73 = sphi 0, %s72
      %s89 = sphi 0, %s73
      %s95 = sphi 0, %s97
      %s98 = sphi 0, %s95
      %s99 = sphi 0, %s98
      %s115 = sphi 0, %s99
    $region4: #{tpu_custom_call.1} parent=1 // loop_header_branch
      %15 = sbr.rel (%p13) target = $region8
    $region5: #{tpu_custom_call.1} parent=1 // loop_body
      %s17 = ssub.s32 %s12, 1
      %s18 = ssub.s32 %s12, 2
      %s19 = sadd.s32 %s12, 1
      %s21 = sadd.s32 %s20, 1
      %p24 = scmp.eq.s32.totalorder %s12, 1
      %p25 = scmp.ne.s32.totalorder %s20, %s22
      %p26 = scmp.eq.s32.totalorder %s12, 0
      %p27 = por %p25, %p26
      %p28 = scmp.ne.s32.totalorder %s20, %s22
      %p29 = scmp.eq.s32.totalorder %s17, 1
      %p30 = por %p28, %p29
      %p31 = scmp.ne.s32.totalorder %s22, %s23
      %p32 = scmp.eq.s32.totalorder %s17, 0
      %p33 = por %p31, %p32
      %p34 = scmp.ne.s32.totalorder %s22, %s23
      %p35 = scmp.eq.s32.totalorder %s18, 1
      %p36 = por %p34, %p35
      %p38 = scmp.ne.s32.totalorder %s23, %s37
      %p39 = scmp.eq.s32.totalorder %s18, 0
      %p40 = por %p38, %p39
      %s41 = ssub.s32 %s12, %s19
      %p42 = scmp.eq.s32.totalorder %s41, 0
      %s44 = sadd.s32 %s43, 1
      %s45 = scalar_select %p42, %s43, %s44
      %p48 = pneg %p42
      %p49 = scmp.eq.s32.totalorder %s12, 1
      %p50 = por %p48, %p49
      %p51 = scmp.ne.s32.totalorder %s43, %s46
      %p52 = scmp.eq.s32.totalorder %s12, 0
      %p53 = por %p51, %p52
      %p54 = scmp.ne.s32.totalorder %s43, %s46
      %p55 = scmp.eq.s32.totalorder %s17, 1
      %p56 = por %p54, %p55
      %p57 = scmp.ne.s32.totalorder %s46, %s47
      %p58 = scmp.eq.s32.totalorder %s17, 0
      %p59 = por %p57, %p58
      %p60 = scmp.ne.s32.totalorder %s46, %s47
      %p61 = scmp.eq.s32.totalorder %s18, 1
      %p62 = por %p60, %p61
      %p64 = scmp.ne.s32.totalorder %s47, %s63
      %p65 = scmp.eq.s32.totalorder %s18, 0
      %p66 = por %p64, %p65
      %s67 = ssub.s32 %s12, %s19
      %p68 = scmp.eq.s32.totalorder %s67, 0
      %s70 = sadd.s32 %s69, 1
      %s71 = scalar_select %p68, %s69, %s70
      %p74 = pneg %p68
      %p75 = scmp.eq.s32.totalorder %s12, 1
      %p76 = por %p74, %p75
      %p77 = scmp.ne.s32.totalorder %s69, %s72
      %p78 = scmp.eq.s32.totalorder %s12, 0
      %p79 = por %p77, %p78
      %p80 = scmp.ne.s32.totalorder %s69, %s72
      %p81 = scmp.eq.s32.totalorder %s17, 1
      %p82 = por %p80, %p81
      %p83 = scmp.ne.s32.totalorder %s72, %s73
      %p84 = scmp.eq.s32.totalorder %s17, 0
      %p85 = por %p83, %p84
      %p86 = scmp.ne.s32.totalorder %s72, %s73
      %p87 = scmp.eq.s32.totalorder %s18, 1
      %p88 = por %p86, %p87
      %p90 = scmp.ne.s32.totalorder %s73, %s89
      %p91 = scmp.eq.s32.totalorder %s18, 0
      %p92 = por %p90, %p91
      %s93 = ssub.s32 %s12, %s19
      %p94 = scmp.eq.s32.totalorder %s93, 0
      %s96 = sadd.s32 %s95, 1
      %s97 = scalar_select %p94, %s95, %s96
      %p100 = pneg %p94
      %p101 = scmp.eq.s32.totalorder %s12, 1
      %p102 = por %p100, %p101
      %p103 = scmp.ne.s32.totalorder %s95, %s98
      %p104 = scmp.eq.s32.totalorder %s12, 0
      %p105 = por %p103, %p104
      %p106 = scmp.ne.s32.totalorder %s95, %s98
      %p107 = scmp.eq.s32.totalorder %s17, 1
      %p108 = por %p106, %p107
      %p109 = scmp.ne.s32.totalorder %s98, %s99
      %p110 = scmp.eq.s32.totalorder %s17, 0
      %p111 = por %p109, %p110
      %p112 = scmp.ne.s32.totalorder %s98, %s99
      %p113 = scmp.eq.s32.totalorder %s18, 1
      %p114 = por %p112, %p113
      %p116 = scmp.ne.s32.totalorder %s99, %s115
      %p117 = scmp.eq.s32.totalorder %s18, 0
      %p118 = por %p116, %p117
      %p119 = scmp.le.s32.totalorder 1, %s12
      %p120 = scmp.lt.s32.totalorder %s12, 3
      %p121 = pnand %p119, %p120
      %p122 = pneg %p121
      // Predicated region
      $region9: #{tpu_custom_call.1} parent=5 // pred_check
        _
      $region10: #{tpu_custom_call.1} parent=5 // pred_check_branch
        %124 = sbr.rel (%p121) target = $region12
      $region11: #{tpu_custom_call.1} parent=5 // pred_region
        %s125 = ssub.s32 %s12, 1
        // Predicated region
        $region13: #{tpu_custom_call.1} parent=11 // pred_check
          %p126 = pneg %p33
        $region14: #{tpu_custom_call.1} parent=11 // pred_check_branch
          %128 = sbr.rel (%p126) target = $region16
        $region15: #{tpu_custom_call.1} parent=11 // pred_region
          _
        $region16: #{tpu_custom_call.1} parent=11 // pred_fallthru
          _
      $region12: #{tpu_custom_call.1} parent=5 // pred_fallthru
        _
      %p129 = scmp.lt.s32.totalorder %s12, 2
      // Predicated region
      $region17: #{tpu_custom_call.1} parent=5 // pred_check
        %p130 = pneg %p129
      $region18: #{tpu_custom_call.1} parent=5 // pred_check_branch
        %132 = sbr.rel (%p130) target = $region20
      $region19: #{tpu_custom_call.1} parent=5 // pred_region
        // Predicated region
        $region21: #{tpu_custom_call.1} parent=19 // pred_check
          %p133 = pneg %p53
        $region22: #{tpu_custom_call.1} parent=19 // pred_check_branch
          %135 = sbr.rel (%p133) target = $region24
        $region23: #{tpu_custom_call.1} parent=19 // pred_region
          %s136 = sand.u32 %s43, 1
          %s137 = sand.u32 %s43, 1
          %s138 = smul.addr %s137, 96
          %s139 = scalar_lea.vmem [#allocation2], %s138
          %s140 = smul.u32 4, %s12
          %s141 = smul.addr %s140, 8
          %s142 = scalar_lea.vmem %s1, %s141
          // Predicated region
          $region25: #{tpu_custom_call.1} parent=23 // pred_check
            _
          $region26: #{tpu_custom_call.1} parent=23 // pred_check_branch
            %144 = sbr.rel (0) target = $region28
          $region27: #{tpu_custom_call.1} parent=23 // pred_region
            // Predicated region
            $region29: #{tpu_custom_call.1} parent=27 // pred_check
              _
            $region30: #{tpu_custom_call.1} parent=27 // pred_check_branch
              %146 = sbr.rel (0) target = $region32
            $region31: #{tpu_custom_call.1} parent=27 // pred_region
              // Predicated region
              $region44: #{tpu_custom_call.1} parent=31 // pred_check
                _
              $region45: #{tpu_custom_call.1} parent=31 // pred_check_branch
                %184 = sbr.rel (0) target = $region47
              $region46: #{tpu_custom_call.1} parent=31 // pred_region
                loop: start=0, step=1, limit=1
                $region48: #{tpu_custom_call.1} parent=46 // loop_pre_header
                  _
                $region49: #{tpu_custom_call.1} parent=46 // loop_header
                  %s186 = sphi 0, %s190
                  %p187 = scmp.ge.s32.totalorder %s186, 1
                  %s191 = sphi %s142, %s142
                  %s192 = sphi %s139, %s139
                $region50: #{tpu_custom_call.1} parent=46 // loop_header_branch
                  %189 = sbr.rel (%p187) target = $region54
                $region51: #{tpu_custom_call.1} parent=46 // loop_body
                  %v193 = vld [vmem:[%s191] sm:$0xff]
                  %194 = vst [vmem:[%s192] sm:$0xff] %v193
                  %v195 = vld [vmem:[%s191 + $0x8] sm:$0xff]
                  %196 = vst [vmem:[%s192 + $0x8] sm:$0xff] %v195
                  %v197 = vld [vmem:[%s191 + $0x10] sm:$0xff]
                  %198 = vst [vmem:[%s192 + $0x10] sm:$0xff] %v197
                  %v199 = vld [vmem:[%s191 + $0x18] sm:$0xff]
                  %200 = vst [vmem:[%s192 + $0x18] sm:$0xff] %v199
                  %v201 = vld [vmem:[%s191 + $0x40] sm:$0xff]
                  %202 = vst [vmem:[%s192 + $0x20] sm:$0xff] %v201
                  %v203 = vld [vmem:[%s191 + $0x48] sm:$0xff]
                  %204 = vst [vmem:[%s192 + $0x28] sm:$0xff] %v203
                  %v205 = vld [vmem:[%s191 + $0x50] sm:$0xff]
                  %206 = vst [vmem:[%s192 + $0x30] sm:$0xff] %v205
                  %v207 = vld [vmem:[%s191 + $0x58] sm:$0xff]
                  %208 = vst [vmem:[%s192 + $0x38] sm:$0xff] %v207
                  %v209 = vld [vmem:[%s191 + $0x80] sm:$0xff]
                  %210 = vst [vmem:[%s192 + $0x40] sm:$0xff] %v209
                  %v211 = vld [vmem:[%s191 + $0x88] sm:$0xff]
                  %212 = vst [vmem:[%s192 + $0x48] sm:$0xff] %v211
                  %v213 = vld [vmem:[%s191 + $0x90] sm:$0xff]
                  %214 = vst [vmem:[%s192 + $0x50] sm:$0xff] %v213
                  %v215 = vld [vmem:[%s191 + $0x98] sm:$0xff]
                  %216 = vst [vmem:[%s192 + $0x58] sm:$0xff] %v215
                $region52: #{tpu_custom_call.1} parent=46 // loop_footer
                  %s190 = sadd.s32 1, %s186
                $region53: #{tpu_custom_call.1} parent=46 // loop_footer_branch
                  %185 = sbr.rel target = $region49
                $region54: #{tpu_custom_call.1} parent=46 // loop_exit
                  _
              $region47: #{tpu_custom_call.1} parent=31 // pred_fallthru
                _
              // Predicated region
              $region55: #{tpu_custom_call.1} parent=31 // pred_check
                _
              $region56: #{tpu_custom_call.1} parent=31 // pred_check_branch
                %218 = sbr.rel target = $region58
              $region57: #{tpu_custom_call.1} parent=31 // pred_region
                _
              $region58: #{tpu_custom_call.1} parent=31 // pred_fallthru
                _
            $region32: #{tpu_custom_call.1} parent=27 // pred_fallthru
              _
            // Predicated region
            $region33: #{tpu_custom_call.1} parent=27 // pred_check
              _
            $region34: #{tpu_custom_call.1} parent=27 // pred_check_branch
              %148 = sbr.rel target = $region36
            $region35: #{tpu_custom_call.1} parent=27 // pred_region
              %s150 = ssub.s32 256, 1
              loop: start=0, step=1, limit=1
              $region37: #{tpu_custom_call.1} parent=35 // loop_pre_header
                _
              $region38: #{tpu_custom_call.1} parent=35 // loop_header
                %s152 = sphi 0, %s156
                %p153 = scmp.ge.s32.totalorder %s152, 1
                %s157 = sphi %s142, %s142
                %s158 = sphi %s139, %s139
              $region39: #{tpu_custom_call.1} parent=35 // loop_header_branch
                %155 = sbr.rel (%p153) target = $region43
              $region40: #{tpu_custom_call.1} parent=35 // loop_body
                %v159 = vld [vmem:[%s157] sm:%s150]
                %160 = vst [vmem:[%s158] sm:%s150] %v159
                %v161 = vld [vmem:[%s157 + $0x8] sm:%s150]
                %162 = vst [vmem:[%s158 + $0x8] sm:%s150] %v161
                %v163 = vld [vmem:[%s157 + $0x10] sm:%s150]
                %164 = vst [vmem:[%s158 + $0x10] sm:%s150] %v163
                %v165 = vld [vmem:[%s157 + $0x18] sm:%s150]
                %166 = vst [vmem:[%s158 + $0x18] sm:%s150] %v165
                %v167 = vld [vmem:[%s157 + $0x40] sm:%s150]
                %168 = vst [vmem:[%s158 + $0x20] sm:%s150] %v167
                %v169 = vld [vmem:[%s157 + $0x48] sm:%s150]
                %170 = vst [vmem:[%s158 + $0x28] sm:%s150] %v169
                %v171 = vld [vmem:[%s157 + $0x50] sm:%s150]
                %172 = vst [vmem:[%s158 + $0x30] sm:%s150] %v171
                %v173 = vld [vmem:[%s157 + $0x58] sm:%s150]
                %174 = vst [vmem:[%s158 + $0x38] sm:%s150] %v173
                %v175 = vld [vmem:[%s157 + $0x80] sm:%s150]
                %176 = vst [vmem:[%s158 + $0x40] sm:%s150] %v175
                %v177 = vld [vmem:[%s157 + $0x88] sm:%s150]
                %178 = vst [vmem:[%s158 + $0x48] sm:%s150] %v177
                %v179 = vld [vmem:[%s157 + $0x90] sm:%s150]
                %180 = vst [vmem:[%s158 + $0x50] sm:%s150] %v179
                %v181 = vld [vmem:[%s157 + $0x98] sm:%s150]
                %182 = vst [vmem:[%s158 + $0x58] sm:%s150] %v181
              $region41: #{tpu_custom_call.1} parent=35 // loop_footer
                %s156 = sadd.s32 1, %s152
              $region42: #{tpu_custom_call.1} parent=35 // loop_footer_branch
                %151 = sbr.rel target = $region38
              $region43: #{tpu_custom_call.1} parent=35 // loop_exit
                _
            $region36: #{tpu_custom_call.1} parent=27 // pred_fallthru
              _
          $region28: #{tpu_custom_call.1} parent=23 // pred_fallthru
            _
          %219 = vnop
        $region24: #{tpu_custom_call.1} parent=19 // pred_fallthru
          _
        // Predicated region
        $region59: #{tpu_custom_call.1} parent=19 // pred_check
          %p220 = pneg %p79
        $region60: #{tpu_custom_call.1} parent=19 // pred_check_branch
          %222 = sbr.rel (%p220) target = $region62
        $region61: #{tpu_custom_call.1} parent=19 // pred_region
          %s223 = smul.u32 4, %s12
          %p224 = scmp.lt.s32.totalorder %s223, 7
          %s225 = scalar_select %p224, %s223, 7
          %s226 = smul.addr %s225, 8
          %s227 = scalar_lea.vmem %s2, %s226
          %s228 = smul.u32 4, %s12
        $region62: #{tpu_custom_call.1} parent=19 // pred_fallthru
          _
      $region20: #{tpu_custom_call.1} parent=5 // pred_fallthru
        _
      %p229 = scmp.le.s32.totalorder 1, %s12
      %p230 = scmp.lt.s32.totalorder %s12, 3
      %p231 = pnand %p229, %p230
      %p232 = pneg %p231
      // Predicated region
      $region63: #{tpu_custom_call.1} parent=5 // pred_check
        _
      $region64: #{tpu_custom_call.1} parent=5 // pred_check_branch
        %234 = sbr.rel (%p231) target = $region66
      $region65: #{tpu_custom_call.1} parent=5 // pred_region
        %s235 = ssub.s32 %s12, 1
        %s236 = sand.u32 %s46, 1
        %s237 = sand.u32 %s46, 1
        %s238 = smul.addr %s237, 96
        %s239 = scalar_lea.vmem [#allocation2], %s238
        // Predicated region
        $region67: #{tpu_custom_call.1} parent=65 // pred_check
          %p240 = pneg %p59
        $region68: #{tpu_custom_call.1} parent=65 // pred_check_branch
          %242 = sbr.rel (%p240) target = $region70
        $region69: #{tpu_custom_call.1} parent=65 // pred_region
          _
        $region70: #{tpu_custom_call.1} parent=65 // pred_fallthru
          _
        %p243 = pneg %p33
        %p244 = pneg %p30
        %s245 = sand.u32 %s46, 1
        %s246 = sand.u32 %s46, 1
        %s247 = smul.addr %s246, 96
        %s248 = scalar_lea.vmem [#allocation2], %s247
        %p249 = pneg %p59
        %p250 = pneg %p56
        %s251 = smul.u32 4, %s17
        %p252 = scmp.lt.s32.totalorder %s251, 7
        %s253 = scalar_select %p252, %s251, 7
        %s254 = smul.addr %s253, 8
        %s255 = scalar_lea.vmem %s2, %s254
        %p256 = pneg %p85
        %p257 = pneg %p82
        %p258 = pneg %p111
        %p259 = pneg %p108
        %s260 = sand.u32 %s98, 1
        %s261 = scalar_lea.sflag [#allocation4], %s260
        %s262 = sand.u32 %s98, 1
        %s263 = smul.addr %s262, 16
        %s264 = scalar_lea.vmem [#allocation3], %s263
        %s265 = smul.u32 4, %s17
        %s266 = smul.u32 4, %s17
        %p267 = scmp.lt.s32.totalorder %s266, 7
        %s268 = scalar_select %p267, %s266, 7
        %s269 = smul.addr %s268, 8
        %s270 = scalar_lea.vmem %s2, %s269
        %s271 = smul.u32 4, %s17
        %s272 = smul.u32 4, %s17
        %v273 = vld [vmem:[%s239] sm:$0xff]
        %v274 = vld [vmem:[%s239 + $0x8] sm:$0xff]
        %v275 = vld [vmem:[%s239 + $0x10] sm:$0xff]
        %v276 = vld [vmem:[%s239 + $0x18] sm:$0xff]
        %v277 = vld [vmem:[%s0] sm:$0x1]
        %s278 = scalar_lea.vmem %s239, 32 [#allocation2]
        %v279 = vld [vmem:[%s278] sm:$0xff]
        %v280 = vld [vmem:[%s278 + $0x8] sm:$0xff]
        %v281 = vld [vmem:[%s278 + $0x10] sm:$0xff]
        %v282 = vld [vmem:[%s278 + $0x18] sm:$0xff]
        %v284 = vlaneseq
        %v285 = vshrl.u32 %v284, 7
        %v286 = vsub.s32 0, %v285
        %v287 = vrot.slane %v277, %v286
        %288 = vrot.lane.b32.xlu0 %v287, 127
        %v289 = vpop.permute.xlu0 %288
        %vm290 = vcmask 7168
        %v292 = vsel %vm290, %v279, 0
        %v295 = vsel %vm290, %v280, 0
        %v298 = vsel %vm290, %v281, 0
        %v301 = vsel %vm290, %v282, 0
        %vm303 = vcmask 1040384
        %v304 = vsel %vm303, %v289, 0
        %306 = vmatprep.subr.mxu0 0.0
        %307 = vmatpush1.msra.mxu0 0.0
        %308 = vmatprep.subr.mxu0 0.0
        %309 = vmatpush1.msra.mxu0 0.0
        %310 = vmatprep.subr.mxu0 0.0
        %311 = vmatpush1.msra.mxu0 0.0
        %312 = vmatprep.subr.mxu0 0.0
        %313 = vmatpush1.msra.mxu0 0.0
        %314 = vmatprep.subr.mxu0 0.0
        %315 = vmatpush1.msra.mxu0 0.0
        %316 = vmatprep.subr.mxu0 0.0
        %317 = vmatpush1.msra.mxu0 0.0
        %318 = vmatprep.subr.mxu0 0.0
        %319 = vmatpush1.msra.mxu0 0.0
        %320 = vmatprep.subr.mxu0 0.0
        %321 = vmatpush1.msra.mxu0 0.0
        %322 = vmatprep.subr.mxu0 0.0
        %323 = vmatpush1.msra.mxu0 0.0
        %324 = vmatprep.subr.mxu0 0.0
        %325 = vmatpush1.msra.mxu0 0.0
        %326 = vmatprep.subr.mxu0 0.0
        %327 = vmatpush1.msra.mxu0 0.0
        %328 = vmatprep.subr.mxu0 0.0
        %329 = vmatpush1.msra.mxu0 0.0
        %330 = vmatprep.subr.mxu0 0.0
        %331 = vmatpush1.msra.mxu0 0.0
        %332 = vmatprep.subr.mxu0 0.0
        %333 = vmatpush1.msra.mxu0 0.0
        %334 = vmatprep.subr.mxu0 0.0
        %335 = vmatpush1.msra.mxu0 0.0
        %336 = vmatprep.subr.mxu0 0.0
        %337 = vmatpush1.msra.mxu0 %v304
        %338 = vmatprep.subr.mxu0 0.0
        %339 = vmatpush2.msra.mxu0 0.0
        %340 = vmatprep.subr.mxu0 0.0
        %341 = vmatpush2.msra.mxu0 0.0
        %342 = vmatprep.subr.mxu0 0.0
        %343 = vmatpush2.msra.mxu0 0.0
        %344 = vmatprep.subr.mxu0 0.0
        %345 = vmatpush2.msra.mxu0 0.0
        %346 = vmatprep.subr.mxu0 0.0
        %347 = vmatpush2.msra.mxu0 0.0
        %348 = vmatprep.subr.mxu0 0.0
        %349 = vmatpush2.msra.mxu0 0.0
        %350 = vmatprep.subr.mxu0 0.0
        %351 = vmatpush2.msra.mxu0 0.0
        %352 = vmatprep.subr.mxu0 0.0
        %353 = vmatpush2.msra.mxu0 0.0
        %354 = vmatprep.subr.mxu0 0.0
        %355 = vmatpush2.msra.mxu0 0.0
        %356 = vmatprep.subr.mxu0 0.0
        %357 = vmatpush2.msra.mxu0 0.0
        %358 = vmatprep.subr.mxu0 0.0
        %359 = vmatpush2.msra.mxu0 0.0
        %360 = vmatprep.subr.mxu0 0.0
        %361 = vmatpush2.msra.mxu0 0.0
        %362 = vmatprep.subr.mxu0 0.0
        %363 = vmatpush2.msra.mxu0 0.0
        %364 = vmatprep.subr.mxu0 0.0
        %365 = vmatpush2.msra.mxu0 0.0
        %366 = vmatprep.subr.mxu0 0.0
        %367 = vmatpush2.msra.mxu0 0.0
        %368 = vmatprep.subr.mxu0 0.0
        %369 = vmatpush2.msra.mxu0 0.0
        %370 = vmatprep.mubr.f32.mxu0 0.0
        %371 = vmatmul.mubr.f32.gmra.mxu0 %v292
        %v372 = vpop.f32.mrf.mxu0
        %v373 = vadd.f32 0.0, %v372
        %v374 = vpop.f32.mrf.mxu0
        %375 = vmatprep.mubr.f32.mxu0 0.0
        %376 = vmatmul.mubr.f32.gmra.mxu0 %v295
        %v377 = vpop.f32.mrf.mxu0
        %v378 = vadd.f32 0.0, %v377
        %v379 = vpop.f32.mrf.mxu0
        %380 = vmatprep.mubr.f32.mxu0 0.0
        %381 = vmatmul.mubr.f32.gmra.mxu0 %v298
        %v382 = vpop.f32.mrf.mxu0
        %v383 = vadd.f32 0.0, %v382
        %v384 = vpop.f32.mrf.mxu0
        %385 = vmatprep.mubr.f32.mxu0 0.0
        %386 = vmatmul.mubr.f32.gmra.mxu0 %v301
        %v387 = vpop.f32.mrf.mxu0
        %v388 = vadd.f32 0.0, %v387
        %v389 = vpop.f32.mrf.mxu0
        %390 = vdwg.mxu0
        %v392 = vsel %vm290, %v273, 0
        %v395 = vsel %vm290, %v274, 0
        %v398 = vsel %vm290, %v275, 0
        %v401 = vsel %vm290, %v276, 0
        %v403 = vsel %vm303, %v277, 0
        %405 = vmatprep.subr.mxu0 0.0
        %406 = vmatpush1.msra.mxu0 0.0
        %407 = vmatprep.subr.mxu0 0.0
        %408 = vmatpush1.msra.mxu0 0.0
        %409 = vmatprep.subr.mxu0 0.0
        %410 = vmatpush1.msra.mxu0 0.0
        %411 = vmatprep.subr.mxu0 0.0
        %412 = vmatpush1.msra.mxu0 0.0
        %413 = vmatprep.subr.mxu0 0.0
        %414 = vmatpush1.msra.mxu0 0.0
        %415 = vmatprep.subr.mxu0 0.0
        %416 = vmatpush1.msra.mxu0 0.0
        %417 = vmatprep.subr.mxu0 0.0
        %418 = vmatpush1.msra.mxu0 0.0
        %419 = vmatprep.subr.mxu0 0.0
        %420 = vmatpush1.msra.mxu0 0.0
        %421 = vmatprep.subr.mxu0 0.0
        %422 = vmatpush1.msra.mxu0 0.0
        %423 = vmatprep.subr.mxu0 0.0
        %424 = vmatpush1.msra.mxu0 0.0
        %425 = vmatprep.subr.mxu0 0.0
        %426 = vmatpush1.msra.mxu0 0.0
        %427 = vmatprep.subr.mxu0 0.0
        %428 = vmatpush1.msra.mxu0 0.0
        %429 = vmatprep.subr.mxu0 0.0
        %430 = vmatpush1.msra.mxu0 0.0
        %431 = vmatprep.subr.mxu0 0.0
        %432 = vmatpush1.msra.mxu0 0.0
        %433 = vmatprep.subr.mxu0 0.0
        %434 = vmatpush1.msra.mxu0 0.0
        %435 = vmatprep.subr.mxu0 0.0
        %436 = vmatpush1.msra.mxu0 %v403
        %437 = vmatprep.subr.mxu0 0.0
        %438 = vmatpush2.msra.mxu0 0.0
        %439 = vmatprep.subr.mxu0 0.0
        %440 = vmatpush2.msra.mxu0 0.0
        %441 = vmatprep.subr.mxu0 0.0
        %442 = vmatpush2.msra.mxu0 0.0
        %443 = vmatprep.subr.mxu0 0.0
        %444 = vmatpush2.msra.mxu0 0.0
        %445 = vmatprep.subr.mxu0 0.0
        %446 = vmatpush2.msra.mxu0 0.0
        %447 = vmatprep.subr.mxu0 0.0
        %448 = vmatpush2.msra.mxu0 0.0
        %449 = vmatprep.subr.mxu0 0.0
        %450 = vmatpush2.msra.mxu0 0.0
        %451 = vmatprep.subr.mxu0 0.0
        %452 = vmatpush2.msra.mxu0 0.0
        %453 = vmatprep.subr.mxu0 0.0
        %454 = vmatpush2.msra.mxu0 0.0
        %455 = vmatprep.subr.mxu0 0.0
        %456 = vmatpush2.msra.mxu0 0.0
        %457 = vmatprep.subr.mxu0 0.0
        %458 = vmatpush2.msra.mxu0 0.0
        %459 = vmatprep.subr.mxu0 0.0
        %460 = vmatpush2.msra.mxu0 0.0
        %461 = vmatprep.subr.mxu0 0.0
        %462 = vmatpush2.msra.mxu0 0.0
        %463 = vmatprep.subr.mxu0 0.0
        %464 = vmatpush2.msra.mxu0 0.0
        %465 = vmatprep.subr.mxu0 0.0
        %466 = vmatpush2.msra.mxu0 0.0
        %467 = vmatprep.subr.mxu0 0.0
        %468 = vmatpush2.msra.mxu0 0.0
        %469 = vmatprep.mubr.f32.mxu0 0.0
        %470 = vmatmul.mubr.f32.gmra.mxu0 %v392
        %v471 = vpop.f32.mrf.mxu0
        %v472 = vadd.f32 %v373, %v471
        %v473 = vpop.f32.mrf.mxu0
        %474 = vmatprep.mubr.f32.mxu0 0.0
        %475 = vmatmul.mubr.f32.gmra.mxu0 %v395
        %v476 = vpop.f32.mrf.mxu0
        %v477 = vadd.f32 %v378, %v476
        %v478 = vpop.f32.mrf.mxu0
        %479 = vmatprep.mubr.f32.mxu0 0.0
        %480 = vmatmul.mubr.f32.gmra.mxu0 %v398
        %v481 = vpop.f32.mrf.mxu0
        %v482 = vadd.f32 %v383, %v481
        %v483 = vpop.f32.mrf.mxu0
        %484 = vmatprep.mubr.f32.mxu0 0.0
        %485 = vmatmul.mubr.f32.gmra.mxu0 %v401
        %v486 = vpop.f32.mrf.mxu0
        %v487 = vadd.f32 %v388, %v486
        %v488 = vpop.f32.mrf.mxu0
        %489 = vdwg.mxu0
        %s490 = scalar_lea.vmem %s239, 64 [#allocation2]
        %v491 = vld [vmem:[%s490] sm:$0xff]
        %v492 = vld [vmem:[%s490 + $0x8] sm:$0xff]
        %v493 = vld [vmem:[%s490 + $0x10] sm:$0xff]
        %v494 = vld [vmem:[%s490 + $0x18] sm:$0xff]
        %495 = vrot.lane.b32.xlu0 %v287, 126
        %v496 = vpop.permute.xlu0 %495
        %v498 = vsel %vm290, %v491, 0
        %v501 = vsel %vm290, %v492, 0
        %v504 = vsel %vm290, %v493, 0
        %v507 = vsel %vm290, %v494, 0
        %v509 = vsel %vm303, %v496, 0
        %511 = vmatprep.subr.mxu0 0.0
        %512 = vmatpush1.msra.mxu0 0.0
        %513 = vmatprep.subr.mxu0 0.0
        %514 = vmatpush1.msra.mxu0 0.0
        %515 = vmatprep.subr.mxu0 0.0
        %516 = vmatpush1.msra.mxu0 0.0
        %517 = vmatprep.subr.mxu0 0.0
        %518 = vmatpush1.msra.mxu0 0.0
        %519 = vmatprep.subr.mxu0 0.0
        %520 = vmatpush1.msra.mxu0 0.0
        %521 = vmatprep.subr.mxu0 0.0
        %522 = vmatpush1.msra.mxu0 0.0
        %523 = vmatprep.subr.mxu0 0.0
        %524 = vmatpush1.msra.mxu0 0.0
        %525 = vmatprep.subr.mxu0 0.0
        %526 = vmatpush1.msra.mxu0 0.0
        %527 = vmatprep.subr.mxu0 0.0
        %528 = vmatpush1.msra.mxu0 0.0
        %529 = vmatprep.subr.mxu0 0.0
        %530 = vmatpush1.msra.mxu0 0.0
        %531 = vmatprep.subr.mxu0 0.0
        %532 = vmatpush1.msra.mxu0 0.0
        %533 = vmatprep.subr.mxu0 0.0
        %534 = vmatpush1.msra.mxu0 0.0
        %535 = vmatprep.subr.mxu0 0.0
        %536 = vmatpush1.msra.mxu0 0.0
        %537 = vmatprep.subr.mxu0 0.0
        %538 = vmatpush1.msra.mxu0 0.0
        %539 = vmatprep.subr.mxu0 0.0
        %540 = vmatpush1.msra.mxu0 0.0
        %541 = vmatprep.subr.mxu0 0.0
        %542 = vmatpush1.msra.mxu0 %v509
        %543 = vmatprep.subr.mxu0 0.0
        %544 = vmatpush2.msra.mxu0 0.0
        %545 = vmatprep.subr.mxu0 0.0
        %546 = vmatpush2.msra.mxu0 0.0
        %547 = vmatprep.subr.mxu0 0.0
        %548 = vmatpush2.msra.mxu0 0.0
        %549 = vmatprep.subr.mxu0 0.0
        %550 = vmatpush2.msra.mxu0 0.0
        %551 = vmatprep.subr.mxu0 0.0
        %552 = vmatpush2.msra.mxu0 0.0
        %553 = vmatprep.subr.mxu0 0.0
        %554 = vmatpush2.msra.mxu0 0.0
        %555 = vmatprep.subr.mxu0 0.0
        %556 = vmatpush2.msra.mxu0 0.0
        %557 = vmatprep.subr.mxu0 0.0
        %558 = vmatpush2.msra.mxu0 0.0
        %559 = vmatprep.subr.mxu0 0.0
        %560 = vmatpush2.msra.mxu0 0.0
        %561 = vmatprep.subr.mxu0 0.0
        %562 = vmatpush2.msra.mxu0 0.0
        %563 = vmatprep.subr.mxu0 0.0
        %564 = vmatpush2.msra.mxu0 0.0
        %565 = vmatprep.subr.mxu0 0.0
        %566 = vmatpush2.msra.mxu0 0.0
        %567 = vmatprep.subr.mxu0 0.0
        %568 = vmatpush2.msra.mxu0 0.0
        %569 = vmatprep.subr.mxu0 0.0
        %570 = vmatpush2.msra.mxu0 0.0
        %571 = vmatprep.subr.mxu0 0.0
        %572 = vmatpush2.msra.mxu0 0.0
        %573 = vmatprep.subr.mxu0 0.0
        %574 = vmatpush2.msra.mxu0 0.0
        %575 = vmatprep.mubr.f32.mxu0 0.0
        %576 = vmatmul.mubr.f32.gmra.mxu0 %v498
        %v577 = vpop.f32.mrf.mxu0
        %v578 = vadd.f32 0.0, %v577
        %v579 = vpop.f32.mrf.mxu0
        %580 = vmatprep.mubr.f32.mxu0 0.0
        %581 = vmatmul.mubr.f32.gmra.mxu0 %v501
        %v582 = vpop.f32.mrf.mxu0
        %v583 = vadd.f32 0.0, %v582
        %v584 = vpop.f32.mrf.mxu0
        %585 = vmatprep.mubr.f32.mxu0 0.0
        %586 = vmatmul.mubr.f32.gmra.mxu0 %v504
        %v587 = vpop.f32.mrf.mxu0
        %v588 = vadd.f32 0.0, %v587
        %v589 = vpop.f32.mrf.mxu0
        %590 = vmatprep.mubr.f32.mxu0 0.0
        %591 = vmatmul.mubr.f32.gmra.mxu0 %v507
        %v592 = vpop.f32.mrf.mxu0
        %v593 = vadd.f32 0.0, %v592
        %v594 = vpop.f32.mrf.mxu0
        %595 = vdwg.mxu0
        %v596 = vadd.f32 %v472, %v578
        %v597 = vadd.f32 %v477, %v583
        %v598 = vadd.f32 %v482, %v588
        %v599 = vadd.f32 %v487, %v593
        %v600 = vld [vmem:[%s270] sm:$0xff]
        %v601 = vld [vmem:[%s270 + $0x8] sm:$0xff]
        %v602 = vld [vmem:[%s270 + $0x10] sm:$0xff]
        %v603 = vld [vmem:[%s270 + $0x18] sm:$0xff]
        %605 = vset.pattern.permute.xlu0 0
        %606 = vperm.xlu0 %605, %v600
        %v607 = vpop.permute.xlu0 %606
        %610 = vset.pattern.permute.xlu0 0
        %611 = vperm.xlu0 %610, %v601
        %v612 = vpop.permute.xlu0 %611
        %615 = vset.pattern.permute.xlu0 0
        %616 = vperm.xlu0 %615, %v602
        %v617 = vpop.permute.xlu0 %616
        %620 = vset.pattern.permute.xlu0 0
        %621 = vperm.xlu0 %620, %v603
        %v622 = vpop.permute.xlu0 %621
        %v624 = vadd.f32 %v596, %v607
        %v625 = vadd.f32 %v597, %v612
        %v626 = vadd.f32 %v598, %v617
        %v627 = vadd.f32 %v599, %v622
        %v628 = vmax.f32 %v624, 0.0
        %v629 = vmax.f32 %v625, 0.0
        %v630 = vmax.f32 %v626, 0.0
        %v631 = vmax.f32 %v627, 0.0
        %v632 = vpack.c.bf16 %v629, %v628
        %v633 = vpack.c.bf16 %v631, %v630
        %v636 = vunpack.c.l.b16 %v632
        %v637 = vunpack.c.h.b16 %v632
        %v638 = vunpack.c.l.b16 %v633
        %v639 = vunpack.c.h.b16 %v633
        %v640 = vpack.c.b16 %v636, %v636
        %v641 = vpack.c.b16 %v637, %v637
        %v642 = vpack.c.b16 %v638, %v638
        %v643 = vpack.c.b16 %v639, %v639
        %vm648 = vcmask 519168
        %649 = vst.msk [vmem:[%s264] sm:$0xf] %vm648, %v640
        %650 = vst.msk [vmem:[%s264 + $0x4] sm:$0xf] %vm648, %v641
        %651 = vst.msk [vmem:[%s264 + $0x8] sm:$0xf] %vm648, %v642
        %652 = vst.msk [vmem:[%s264 + $0xc] sm:$0xf] %vm648, %v643
        %s653 = sand.u32 %s98, 1
        %s654 = scalar_lea.sflag [#allocation4], %s653
        %s655 = sand.u32 %s98, 1
        %s656 = smul.addr %s655, 16
        %s657 = scalar_lea.vmem [#allocation3], %s656
        // Predicated region
        $region71: #{tpu_custom_call.1} parent=65 // pred_check
          %p658 = pneg %p108
        $region72: #{tpu_custom_call.1} parent=65 // pred_check_branch
          %660 = sbr.rel (%p658) target = $region74
        $region73: #{tpu_custom_call.1} parent=65 // pred_region
          %s661 = smul.u32 4, %s17
          %s663 = ssub.s32 256, 256
          %664 = vsyncadd %s654, %s663
          %s665 = smul.addr %s661, 64
          %s666 = scalar_lea.hbm %s3, %s665
          %s667 = sshll.u32 %s657, 4
          %s668 = int_to_ptr.vmem [resolvable:$true] %s667
          %673 = dma.vmem_to_hbm [thread:$0]  %s668, 256, %s666, %s654, 64, 64, 4
        $region74: #{tpu_custom_call.1} parent=65 // pred_fallthru
          _
      $region66: #{tpu_custom_call.1} parent=5 // pred_fallthru
        _
      %p674 = scmp.le.s32.totalorder 2, %s12
      // Predicated region
      $region75: #{tpu_custom_call.1} parent=5 // pred_check
        %p675 = pneg %p674
      $region76: #{tpu_custom_call.1} parent=5 // pred_check_branch
        %677 = sbr.rel (%p675) target = $region78
      $region77: #{tpu_custom_call.1} parent=5 // pred_region
        %s678 = ssub.s32 %s12, 2
        // Predicated region
        $region79: #{tpu_custom_call.1} parent=77 // pred_check
          %p679 = pneg %p114
        $region80: #{tpu_custom_call.1} parent=77 // pred_check_branch
          %681 = sbr.rel (%p679) target = $region82
        $region81: #{tpu_custom_call.1} parent=77 // pred_region
          %s682 = sand.u32 %s99, 1
          %s683 = scalar_lea.sflag [#allocation4], %s682
          %s684 = sand.u32 %s99, 1
          %s685 = smul.addr %s684, 16
          %s686 = scalar_lea.vmem [#allocation3], %s685
          %687 = dma.done %s683, 256
        $region82: #{tpu_custom_call.1} parent=77 // pred_fallthru
          _
      $region78: #{tpu_custom_call.1} parent=5 // pred_fallthru
        _
    $region6: #{tpu_custom_call.1} parent=1 // loop_footer
      %s16 = sadd.s32 1, %s12
    $region7: #{tpu_custom_call.1} parent=1 // loop_footer_branch
      %11 = sbr.rel target = $region3
    $region8: #{tpu_custom_call.1} parent=1 // loop_exit
      _
    %688 = vsyncpa [#allocation4], 1
    %s689 = scalar_lea.sflag [#allocation4], 1
    %690 = vsyncpa %s689, 1

</llo_original>
